<compile_context>
chip_gen: v7x
topology: tpu7x:2x2x1
jax: 0.10.0
libtpu: 0.0.40
codegen_flags: <defaults>
</compile_context>

<pallas_src>
import functools

import jax
import jax.numpy as jnp
from jax.experimental import pallas as pl
from jax.experimental.pallas import tpu as pltpu


# --------------------------------------------------------------------------
# Tiny probe: pin down pltpu.roll's rotation direction once, so the conv tap
# shifts can never silently flip the kernel spatially.
# --------------------------------------------------------------------------
_ROLL_MATCHES = None


def _roll_probe_kernel(x_ref, o_ref):
    o_ref[...] = pltpu.roll(x_ref[...], shift=1, axis=1)


def _roll_matches_jnp_roll():
    """True iff pltpu.roll(x, s, axis) == jnp.roll(x, s, axis)."""
    global _ROLL_MATCHES
    if _ROLL_MATCHES is None:
        x = jnp.tile(jnp.arange(128, dtype=jnp.float32)[None, :], (8, 1))
        y = pl.pallas_call(
            _roll_probe_kernel,
            out_shape=jax.ShapeDtypeStruct((8, 128), jnp.float32),
        )(x)
        # jnp.roll(x, 1, axis=1)[0, 1] == x[0, 0] == 0.0
        _ROLL_MATCHES = bool(y[0, 1] == x[0, 0])
    return _ROLL_MATCHES


# --------------------------------------------------------------------------
# Fused Pallas kernel: the whole forward pass for one batch element.
# Layout: activations (C, H*W) f32 — channels in sublanes, pixels in lanes.
# --------------------------------------------------------------------------
def _aistap_fused_kernel(x_ref, seg_ref, w1_ref, b1_ref, w2_ref, b2_ref,
                         w3_ref, b3_ref, w4_ref, b4_ref, out_ref, wout_ref,
                         *, H, W, norm_output, roll_matches):
    HW = H * W
    x = x_ref[0].astype(jnp.float32)          # (2C, HW), planar [Re..., Im...]
    seg = seg_ref[...]                        # (HW, HW) f32 block-diag ones

    # Border-validity masks for the 9 conv taps (built once from a lane iota).
    lane = jax.lax.broadcasted_iota(jnp.int32, (1, HW), 1)
    hh = lane // W
    ww = lane - hh * W
    masks, shifts = [], []
    for kh in range(3):
        for kw in range(3):
            dh, dw = kh - 1, kw - 1
            valid = ((hh + dh >= 0) & (hh + dh < H) &
                     (ww + dw >= 0) & (ww + dw < W))
            masks.append(valid.astype(jnp.float32))           # (1, HW)
            d = dh * W + dw
            shifts.append(((-d) % HW) if roll_matches else (d % HW))

    def conv3x3_same(a, w_r, b_r):
        # a: (Cin, HW) f32.  w_r: (Cout, 9*Cin) bf16 with columns ordered
        # (kh, kw, cin) — must stay in lockstep with the tap order below.
        # b_r: (Cout, 1) f32.
        pieces = []
        for t in range(9):
            shifted = pltpu.roll(a, shift=shifts[t], axis=1) if shifts[t] else a
            pieces.append(shifted * masks[t])                 # zero wrapped border
        patches = jnp.concatenate(pieces, axis=0)             # (9*Cin, HW) f32
        acc = jnp.dot(w_r[...], patches.astype(jnp.bfloat16),
                      preferred_element_type=jnp.float32)     # (Cout, HW) f32
        return acc + b_r[...]

    def antirectifier2(a):
        # torch _antirectifier2 on NCHW reduces over dims (1, 3) == (C, W);
        # here that is (sublanes, groups of W lanes sharing one h).  The
        # per-(n, h) group sums are one aligned matmul with the constant
        # segment matrix; the channel sum is a cheap sublane reduce.
        C = a.shape[0]
        gsum = jnp.dot(a, seg, preferred_element_type=jnp.float32)      # (C, HW)
        mean = jnp.sum(gsum, axis=0, keepdims=True) * (1.0 / (C * W))   # (1, HW)
        cen = a - mean
        gss = jnp.dot(cen * cen, seg, preferred_element_type=jnp.float32)
        ss = jnp.sum(gss, axis=0, keepdims=True)                        # (1, HW)
        # 1 / max(sqrt(ss), 1e-12) == rsqrt(max(ss, 1e-24))  (EUP, no divide)
        inv = jax.lax.rsqrt(jnp.maximum(ss, 1e-24))
        nor = cen * inv
        return jnp.concatenate([jnp.maximum(nor, 0.0),
                                jnp.maximum(-nor, 0.0)], axis=0)        # (2C, HW)

    a = conv3x3_same(x, w1_ref, b1_ref)       # (16,  HW)
    a = antirectifier2(a)                     # (32,  HW)
    a = conv3x3_same(a, w2_ref, b2_ref)       # (32,  HW)
    a = antirectifier2(a)                     # (64,  HW)
    a = conv3x3_same(a, w3_ref, b3_ref)       # (64,  HW)
    a = antirectifier2(a)                     # (128, HW)

    # 1x1 conv == channel matmul.
    w_act = jnp.dot(w4_ref[...], a.astype(jnp.bfloat16),
                    preferred_element_type=jnp.float32) + b4_ref[...]   # (2C, HW)

    if norm_output:
        # torch norm_layer(x, dim=1): L2-normalize over channels only.
        ss = jnp.sum(w_act * w_act, axis=0, keepdims=True)
        w_act = w_act * jax.lax.rsqrt(jnp.maximum(ss, 1e-24))

    # out = w * x_orig (complex multiply) in planar split-real form.
    C0 = x.shape[0] // 2
    wr, wi = w_act[:C0], w_act[C0:]
    xr, xi = x[:C0], x[C0:]
    out = jnp.concatenate([wr * xr - wi * xi, wr * xi + wi * xr], axis=0)

    out_ref[0] = out.astype(out_ref.dtype)
    wout_ref[0] = w_act.astype(wout_ref.dtype)


# --------------------------------------------------------------------------
# Host-side parameter / layout plumbing.
# --------------------------------------------------------------------------
def _prep_conv3x3_weight(w):
    """torch OIHW (Cout, Cin, 3, 3) -> (Cout, 9*Cin) bf16, cols ordered (kh, kw, cin)."""
    co, ci, kh, kw = w.shape
    return jnp.transpose(w, (0, 2, 3, 1)).reshape(co, kh * kw * ci).astype(jnp.bfloat16)


def _full_spec(arr):
    zero = (0,) * arr.ndim
    return pl.BlockSpec(arr.shape, lambda n, _z=zero: _z)


def init_params(key, in_channels_complex):
    """nn.Conv2d-style init, torch OIHW weight layout."""
    cin = 2 * in_channels_complex
    mult_out = (2, 4, 8, 1)
    mult_in = (4, 8, 16, 2)
    keys = jax.random.split(key, 8)

    def uinit(k, shape, fan_in):
        bound = 1.0 / jnp.sqrt(jnp.float32(fan_in))
        return jax.random.uniform(k, shape, jnp.float32, -bound, bound)

    specs = [(cin, cin * mult_out[0], 3),
             (cin * mult_in[0], cin * mult_out[1], 3),
             (cin * mult_in[1], cin * mult_out[2], 3),
             (cin * mult_in[2], cin * mult_out[3], 1)]   # 1x1: 16*cin -> cin
    params = {}
    for i, (ci, co, k) in enumerate(specs, start=1):
        fan = ci * k * k
        params[f"w{i}"] = uinit(keys[2 * i - 2], (co, ci, k, k), fan)
        params[f"b{i}"] = uinit(keys[2 * i - 1], (co,), fan)
    return params


def aistap_cnn_forward(params, x_in, noise_var=0.0, norm_output=False):
    """x_in: complex64 (N, H, W, C).  Returns (out, w) like the torch module."""
    if noise_var != 0:
        # TODO(synk): gen_tapered_noise_torch is not provided in the spec; the
        # noise path cannot be implemented faithfully, so fail loudly.
        raise NotImplementedError("noise_var != 0 path is not implemented")

    N, H, W, C = x_in.shape
    C2 = 2 * C
    HW = H * W

    # Planar split-real [Re(0..C-1), Im(0..C-1)], channels leading, pixels in lanes.
    # TODO(synk): verify this split-real channel ordering against the project's
    # torch view_real/view_complex before loading real PyTorch weights.
    x_split = jnp.concatenate([jnp.real(x_in), jnp.imag(x_in)], axis=-1)   # (N,H,W,2C)
    x_chw = jnp.transpose(x_split, (0, 3, 1, 2)).reshape(N, C2, HW).astype(jnp.float32)

    # Host-side weight plumbing (free): exactly the layouts the kernel consumes.
    w1 = _prep_conv3x3_weight(params["w1"]); b1 = params["b1"].reshape(-1, 1).astype(jnp.float32)
    w2 = _prep_conv3x3_weight(params["w2"]); b2 = params["b2"].reshape(-1, 1).astype(jnp.float32)
    w3 = _prep_conv3x3_weight(params["w3"]); b3 = params["b3"].reshape(-1, 1).astype(jnp.float32)
    w4 = params["w4"].reshape(params["w4"].shape[0], -1).astype(jnp.bfloat16)
    b4 = params["b4"].reshape(-1, 1).astype(jnp.float32)

    # Constant block-diagonal segment-sum matrix for the per-(n, h) reductions.
    pix = jnp.arange(HW, dtype=jnp.int32)
    seg = (pix[:, None] // W == pix[None, :] // W).astype(jnp.float32)     # (HW, HW)

    img_spec = lambda: pl.BlockSpec((1, C2, HW), lambda n: (n, 0, 0))
    roll_matches = _roll_matches_jnp_roll()

    out_chw, w_chw = pl.pallas_call(
        functools.partial(_aistap_fused_kernel, H=H, W=W,
                          norm_output=norm_output, roll_matches=roll_matches),
        out_shape=(jax.ShapeDtypeStruct((N, C2, HW), jnp.float32),
                   jax.ShapeDtypeStruct((N, C2, HW), jnp.float32)),
        grid_spec=pltpu.PrefetchScalarGridSpec(
            num_scalar_prefetch=0,
            grid=(N,),
            in_specs=[img_spec(),
                      _full_spec(seg),
                      _full_spec(w1), _full_spec(b1),
                      _full_spec(w2), _full_spec(b2),
                      _full_spec(w3), _full_spec(b3),
                      _full_spec(w4), _full_spec(b4)],
            out_specs=(img_spec(), img_spec()),
        ),
        compiler_params=pltpu.CompilerParams(
            dimension_semantics=("parallel",),      # v7x: one TC per batch element
            vmem_limit_bytes=32 * 1024 * 1024,
        ),
    )(x_chw, seg, w1, b1, w2, b2, w3, b3, w4, b4)

    def unpack(y):
        y = y.reshape(N, C2, H, W).transpose(0, 2, 3, 1)                  # (N,H,W,2C)
        return jax.lax.complex(y[..., :C], y[..., C:])

    return unpack(out_chw), unpack(w_chw)


# --------------------------------------------------------------------------
# Pure-JAX (XLA) reference mirroring the torch module, for a logic/layout check.
# --------------------------------------------------------------------------
def _reference_forward(params, x_in, norm_output=False):
    N, H, W, C = x_in.shape
    x_split = jnp.concatenate([jnp.real(x_in), jnp.imag(x_in)], axis=-1)
    v = jnp.transpose(x_split, (0, 3, 1, 2)).astype(jnp.float32)          # NCHW

    def conv(z, w, b, pad):
        y = jax.lax.conv_general_dilated(
            z, w, window_strides=(1, 1), padding=[(pad, pad), (pad, pad)],
            dimension_numbers=("NCHW", "OIHW", "NCHW"),
            precision=jax.lax.Precision.HIGHEST)
        return y + b[None, :, None, None]

    def anti(z):
        m = jnp.mean(z, axis=(1, 3), keepdims=True)
        c = z - m
        n = jnp.sqrt(jnp.sum(c * c, axis=(1, 3), keepdims=True))
        nor = c / jnp.maximum(n, 1e-12)
        return jnp.concatenate([jnp.maximum(nor, 0.0), jnp.maximum(-nor, 0.0)], axis=1)

    v = anti(conv(v, params["w1"], params["b1"], 1))
    v = anti(conv(v, params["w2"], params["b2"], 1))
    v = anti(conv(v, params["w3"], params["b3"], 1))
    v = conv(v, params["w4"], params["b4"], 0)
    if norm_output:
        n = jnp.sqrt(jnp.sum(v * v, axis=1, keepdims=True))
        v = v / jnp.maximum(n, 1e-12)
    v = jnp.transpose(v, (0, 2, 3, 1))                                    # (N,H,W,2C)
    w = jax.lax.complex(v[..., :C], v[..., C:])
    return w * x_in, w


# --------------------------------------------------------------------------
if __name__ == "__main__":
    key = jax.random.PRNGKey(0)
    N, H, W, C = 2, 16, 16, 4                  # C = complex channel count

    k_re, k_im, k_p = jax.random.split(key, 3)
    x_in = jax.lax.complex(
        jax.random.normal(k_re, (N, H, W, C), jnp.float32),
        jax.random.normal(k_im, (N, H, W, C), jnp.float32))
    params = init_params(k_p, in_channels_complex=C)

    for norm_output in (False, True):
        out, w = aistap_cnn_forward(params, x_in, noise_var=0.0, norm_output=norm_output)
        out, w = jax.block_until_ready((out, w))

        assert out.shape == (N, H, W, C) and w.shape == (N, H, W, C)
        assert bool(jnp.all(jnp.isfinite(jnp.abs(out))))
        assert bool(jnp.all(jnp.isfinite(jnp.abs(w))))

        # Loose check against the f32 XLA reference (kernel matmul operands are
        # bf16, so this is a logic/layout check, not a bit-exactness check).
        out_r, w_r = _reference_forward(params, x_in, norm_output=norm_output)
        for got, ref in ((out, out_r), (w, w_r)):
            err = float(jnp.max(jnp.abs(got - ref)))
            scale = float(jnp.max(jnp.abs(ref))) + 1e-6
            assert err / scale < 1e-1, (
                f"mismatch vs reference: rel_err={err / scale:.3e} "
                f"(norm_output={norm_output})")

    print("KERNEL_OK")
</pallas_src>

<mosaic_0001>
module attributes {stable_mosaic.version = 11 : i64} {
  func.func @_roll_probe_kernel(%arg0: memref<8x128xf32, #tpu.memory_space<vmem>>, %arg1: memref<8x128xf32, #tpu.memory_space<vmem>>) attributes {dimension_semantics = [], scalar_prefetch = 0 : i64, scratch_operands = 0 : i64, tpu.core_type = #tpu.core_type<tc>} {
    %c0 = arith.constant 0 : index
    %c0_0 = arith.constant 0 : index
    %0 = vector.load %arg0[%c0, %c0_0] : memref<8x128xf32, #tpu.memory_space<vmem>>, vector<8x128xf32>
    %c1_i32 = arith.constant 1 : i32
    %1 = tpu.dynamic_rotate %0 by %c1_i32 dim 1 : vector<8x128xf32>, i32 -> vector<8x128xf32>
    %c0_1 = arith.constant 0 : index
    %c0_2 = arith.constant 0 : index
    %2 = vector.load %arg1[%c0_1, %c0_2] : memref<8x128xf32, #tpu.memory_space<vmem>>, vector<8x128xf32>
    tpu.vector_store %arg1[%c0_1, %c0_2], %1 {strides = array<i32>} : memref<8x128xf32, #tpu.memory_space<vmem>>, vector<8x128xf32>,
    return
  }
}

</mosaic_0001>

<llo_original>
// kernel: tpu_custom_call.1
$region0: #{tpu_custom_call.1}
  #allocation0 [shape = 'u32[]', space=smem, size = 0x4, offset = 0x4, fixed_abs, tag = 'smem constant byte address 0x4 - core index']
  #allocation1 [shape = 'u32[144,128]{1,0:T(1,128)}', space=vmem, size = 0x12000, scoped, tag = 'internal scratch']
  %s0 = inlined_call_operand.hbm [shape: f32[8,128], index: 0, kind: input, shape index: {}]
  %s1 = inlined_call_operand.hbm [shape: f32[8,128], index: 1, kind: output, shape index: {}]
  %s2 = sld [smem:[#allocation0]]
  $region18: #{tpu_custom_call.1} parent=0
    _
  %s4 = ssub.s32 1, %s2
  %s5 = scalar_select 0, %s4, %s2
  $region1: #{tpu_custom_call.1} parent=0
    #allocation2 [shape = 'u8[4096]{0}', space=vmem, size = 0x1000, scoped, tag = 'input window, operand 0, single buffered']
    #allocation3 [shape = 's32[1]{0}', space=sflag, size = 0x4, scoped, tag = 'scoped memory for tpu_custom_call.1']
    #allocation4 [shape = 's32[1]{0}', space=sflag, size = 0x4, scoped, tag = 'scoped memory for tpu_custom_call.1']
    #allocation5 [shape = 'u8[4096]{0}', space=vmem, size = 0x1000, scoped, tag = 'output window, operand 0, single buffered']
    %6 = vsyncpa [#allocation3], 0
    %7 = vsyncpa [#allocation4], 0
    // Predicated region
    $region2: #{tpu_custom_call.1} parent=1 // pred_check
      _
    $region3: #{tpu_custom_call.1} parent=1 // pred_check_branch
      %9 = sbr.rel (0) target = $region5
    $region4: #{tpu_custom_call.1} parent=1 // pred_region
      %s11 = ssub.s32 128, 128
      %12 = vsyncadd [#allocation3], %s11
      %s14 = sshll.u32 [#allocation2], 4
      %s15 = int_to_ptr.vmem [resolvable:$true] %s14
      %17 = dma.hbm_to_vmem [thread:$0]  %s0, 128, %s15, [#allocation3]
    $region5: #{tpu_custom_call.1} parent=1 // pred_fallthru
      _
    // Predicated region
    $region6: #{tpu_custom_call.1} parent=1 // pred_check
      _
    $region7: #{tpu_custom_call.1} parent=1 // pred_check_branch
      %19 = sbr.rel (0) target = $region9
    $region8: #{tpu_custom_call.1} parent=1 // pred_region
      %20 = dma.done [#allocation3], 128
    $region9: #{tpu_custom_call.1} parent=1 // pred_fallthru
      _
    %v21 = vld [vmem:[#allocation2] sm:$0xff]
    %22 = vrot.lane.b32.xlu0 %v21, 1
    %v23 = vpop.permute.xlu0 %22
    %24 = vst [vmem:[#allocation5] sm:$0xff] %v23
    // Predicated region
    $region10: #{tpu_custom_call.1} parent=1 // pred_check
      _
    $region11: #{tpu_custom_call.1} parent=1 // pred_check_branch
      %26 = sbr.rel (0) target = $region13
    $region12: #{tpu_custom_call.1} parent=1 // pred_region
      %s28 = ssub.s32 128, 128
      %29 = vsyncadd [#allocation4], %s28
      %s31 = sshll.u32 [#allocation5], 4
      %s32 = int_to_ptr.vmem [resolvable:$true] %s31
      %34 = dma.vmem_to_hbm [thread:$0]  %s32, 128, %s1, [#allocation4]
    $region13: #{tpu_custom_call.1} parent=1 // pred_fallthru
      _
    // Predicated region
    $region14: #{tpu_custom_call.1} parent=1 // pred_check
      _
    $region15: #{tpu_custom_call.1} parent=1 // pred_check_branch
      %36 = sbr.rel (0) target = $region17
    $region16: #{tpu_custom_call.1} parent=1 // pred_region
      %37 = dma.done [#allocation4], 128
    $region17: #{tpu_custom_call.1} parent=1 // pred_fallthru
      _
    %38 = vsyncpa [#allocation3], 1
    %39 = vsyncpa [#allocation4], 1

</llo_original>
